<compile_context>
chip_gen: v6e
topology: v6e:2x2x1
jax: 0.10.0
libtpu: 0.0.40
codegen_flags: <defaults>
</compile_context>

<pallas_src>
import jax
import jax.numpy as jnp
from jax.experimental import pallas as pl
from jax.experimental.pallas import tpu as pltpu

_TARGET_TILE_BYTES = 2 << 20  # ~2 MiB per buffer; in+out double-buffered ~8 MiB


def _normalize_kernel(x_ref, mean_ref, std_ref, o_ref):
    # x_ref: (tile_rows, tile_hw); mean_ref/std_ref: (tile_rows, 1) f32.
    xf = x_ref[...].astype(jnp.float32)
    inv = 1.0 / std_ref[...]                      # tiny (tile_rows, 1) reciprocal
    o_ref[...] = ((xf - mean_ref[...]) * inv).astype(o_ref.dtype)


def _largest_divisor_tile(total, unit, max_elems):
    """Largest multiple of `unit` that divides `total` and is <= max_elems.
    Falls back to `total` (the full extent is always a legal block dim)."""
    best = None
    d = unit
    limit = min(total, max_elems)
    while d <= limit:
        if total % d == 0:
            best = d
        d += unit
    return best if best is not None else total


def _pick_tiles(rows, hw, itemsize):
    target_elems = max(_TARGET_TILE_BYTES // itemsize, 1)
    # Prefer keeping the full, lane-dense last dim; only split it if even an
    # 8-row slab would blow the per-buffer budget.
    if 8 * hw <= target_elems or rows == 1:
        tile_hw = hw
    else:
        tile_hw = _largest_divisor_tile(hw, 128, max(target_elems // 8, 128))
    row_budget = max(target_elems // tile_hw, 1)
    if rows <= 8 or row_budget >= rows:
        tile_rows = rows
    else:
        tile_rows = _largest_divisor_tile(rows, 8, row_budget)
    return tile_rows, tile_hw


def normalize_by_channel_mean_std(x, mean, std):
    """Equivalent of tensor.sub(mean[None,:,None,None]).div(std[None,:,None,None])."""
    N, C, H, W = x.shape
    assert mean.shape == (C,) and std.shape == (C,)

    rows = N * C
    hw = H * W
    itemsize = jnp.dtype(x.dtype).itemsize

    # Flattened, lane-dense view of the input.
    x2 = x.reshape(rows, hw)

    # Per-row parameters in f32: row r corresponds to channel r % C.
    mean_rows = jnp.broadcast_to(mean.astype(jnp.float32)[None, :], (N, C)).reshape(rows, 1)
    std_rows = jnp.broadcast_to(std.astype(jnp.float32)[None, :], (N, C)).reshape(rows, 1)

    tile_rows, tile_hw = _pick_tiles(rows, hw, itemsize)
    grid = (rows // tile_rows, hw // tile_hw)

    out2 = pl.pallas_call(
        _normalize_kernel,
        out_shape=jax.ShapeDtypeStruct((rows, hw), x.dtype),
        grid=grid,
        in_specs=[
            pl.BlockSpec((tile_rows, tile_hw), lambda i, j: (i, j)),
            pl.BlockSpec((tile_rows, 1), lambda i, j: (i, 0)),
            pl.BlockSpec((tile_rows, 1), lambda i, j: (i, 0)),
        ],
        out_specs=pl.BlockSpec((tile_rows, tile_hw), lambda i, j: (i, j)),
        compiler_params=pltpu.CompilerParams(
            dimension_semantics=("parallel", "parallel"),
            vmem_limit_bytes=32 * 1024 * 1024,
        ),
    )(x2, mean_rows, std_rows)

    return out2.reshape(N, C, H, W)


if __name__ == "__main__":
    key = jax.random.PRNGKey(0)
    kx, km, ks = jax.random.split(key, 3)

    N, C, H, W = 2, 4, 16, 16
    x = jax.random.normal(kx, (N, C, H, W), dtype=jnp.float32)

    # Deterministic "buffers" (the module's registered mean/std, shape (C,)).
    mean = jax.random.uniform(km, (C,), dtype=jnp.float32, minval=0.2, maxval=0.8)
    std = jax.random.uniform(ks, (C,), dtype=jnp.float32, minval=0.1, maxval=0.5)

    out = normalize_by_channel_mean_std(x, mean, std)
    out = jax.block_until_ready(out)

    # Reference check (plain JAX, same broadcasting as the PyTorch module).
    ref = (x - mean[None, :, None, None]) / std[None, :, None, None]
    assert out.shape == x.shape and out.dtype == x.dtype
    assert jnp.allclose(out, ref, atol=1e-6, rtol=1e-5)

    print("KERNEL_OK")
</pallas_src>

<mosaic_0001>
module attributes {stable_mosaic.version = 11 : i64} {
  func.func @_normalize_kernel(%arg0: i32, %arg1: i32, %arg2: memref<8x256xf32, #tpu.memory_space<vmem>>, %arg3: memref<8x1xf32, #tpu.memory_space<vmem>>, %arg4: memref<8x1xf32, #tpu.memory_space<vmem>>, %arg5: memref<8x256xf32, #tpu.memory_space<vmem>>) attributes {dimension_semantics = [#tpu.dimension_semantics<parallel>, #tpu.dimension_semantics<parallel>], iteration_bounds = array<i64: 1, 1>, scalar_prefetch = 0 : i64, scratch_operands = 0 : i64, tpu.core_type = #tpu.core_type<tc>, window_params = [{transform_indices = @transform_0, window_bounds = array<i64: 8, 256>}, {transform_indices = @transform_1, window_bounds = array<i64: 8, 1>}, {transform_indices = @transform_2, window_bounds = array<i64: 8, 1>}, {transform_indices = @transform_3, window_bounds = array<i64: 8, 256>}]} {
    %c0 = arith.constant 0 : index
    %c0_0 = arith.constant 0 : index
    %0 = vector.load %arg2[%c0, %c0_0] : memref<8x256xf32, #tpu.memory_space<vmem>>, vector<8x256xf32>
    %c0_1 = arith.constant 0 : index
    %c0_2 = arith.constant 0 : index
    %1 = vector.load %arg4[%c0_1, %c0_2] : memref<8x1xf32, #tpu.memory_space<vmem>>, vector<8x1xf32>
    %cst = arith.constant 1.000000e+00 : f32
    %2 = vector.broadcast %cst : f32 to vector<8x1xf32>
    %3 = arith.divf %2, %1 : vector<8x1xf32>
    %c0_3 = arith.constant 0 : index
    %c0_4 = arith.constant 0 : index
    %4 = vector.load %arg3[%c0_3, %c0_4] : memref<8x1xf32, #tpu.memory_space<vmem>>, vector<8x1xf32>
    %5 = vector.broadcast %4 : vector<8x1xf32> to vector<8x256xf32>
    %6 = arith.subf %0, %5 : vector<8x256xf32>
    %7 = vector.broadcast %3 : vector<8x1xf32> to vector<8x256xf32>
    %8 = arith.mulf %6, %7 : vector<8x256xf32>
    %c0_5 = arith.constant 0 : index
    %c0_6 = arith.constant 0 : index
    %9 = vector.load %arg5[%c0_5, %c0_6] : memref<8x256xf32, #tpu.memory_space<vmem>>, vector<8x256xf32>
    tpu.vector_store %arg5[%c0_5, %c0_6], %8 {strides = array<i32>} : memref<8x256xf32, #tpu.memory_space<vmem>>, vector<8x256xf32>,
    return
  }
  func.func @transform_0(%arg0: i32, %arg1: i32) -> (i32, i32) {
    %c0_i32 = arith.constant 0 : i32
    return %arg0, %arg1 : i32, i32
  }
  func.func @transform_1(%arg0: i32, %arg1: i32) -> (i32, i32) {
    %c0_i32 = arith.constant 0 : i32
    %c0_i32_0 = arith.constant 0 : i32
    return %arg0, %c0_i32 : i32, i32
  }
  func.func @transform_2(%arg0: i32, %arg1: i32) -> (i32, i32) {
    %c0_i32 = arith.constant 0 : i32
    %c0_i32_0 = arith.constant 0 : i32
    return %arg0, %c0_i32 : i32, i32
  }
  func.func @transform_3(%arg0: i32, %arg1: i32) -> (i32, i32) {
    %c0_i32 = arith.constant 0 : i32
    return %arg0, %arg1 : i32, i32
  }
}

</mosaic_0001>

<llo_original>
// kernel: tpu_custom_call.1
$region0: #{tpu_custom_call.1}
  #allocation0 [shape = 'u32[]', space=smem, size = 0x4, offset = 0x4, fixed_abs, tag = 'smem constant byte address 0x4 - core index']
  #allocation1 [shape = 'u32[144,128]{1,0:T(1,128)}', space=vmem, size = 0x12000, scoped, tag = 'internal scratch']
  %s0 = inlined_call_operand.vmem [shape: f32[8,256], index: 0, kind: input, shape index: {}]
  %s1 = inlined_call_operand.vmem [shape: f32[8,1], index: 1, kind: input, shape index: {}]
  %s2 = inlined_call_operand.vmem [shape: f32[8,1], index: 2, kind: input, shape index: {}]
  %s3 = inlined_call_operand.hbm [shape: f32[8,256], index: 3, kind: output, shape index: {}]
  %s4 = sld [smem:[#allocation0]]
  $region22: #{tpu_custom_call.1} parent=0
    _
  %s6 = ssub.s32 1, %s4
  %s7 = scalar_select 0, %s6, %s4
  $region1: #{tpu_custom_call.1} parent=0
    #allocation2 [shape = 'u8[8192]{0}', space=vmem, size = 0x2000, scoped, tag = 'output window, operand 0, single buffered']
    #allocation3 [shape = 's32[1]{0}', space=sflag, size = 0x4, scoped, tag = 'scoped memory for tpu_custom_call.1']
    %8 = vsyncpa [#allocation3], 0
    // Predicated region
    $region2: #{tpu_custom_call.1} parent=1 // pred_check
      _
    $region3: #{tpu_custom_call.1} parent=1 // pred_check_branch
      %10 = sbr.rel (0) target = $region5
    $region4: #{tpu_custom_call.1} parent=1 // pred_region
      _
    $region5: #{tpu_custom_call.1} parent=1 // pred_fallthru
      _
    // Predicated region
    $region6: #{tpu_custom_call.1} parent=1 // pred_check
      _
    $region7: #{tpu_custom_call.1} parent=1 // pred_check_branch
      %12 = sbr.rel (0) target = $region9
    $region8: #{tpu_custom_call.1} parent=1 // pred_region
      _
    $region9: #{tpu_custom_call.1} parent=1 // pred_fallthru
      _
    // Predicated region
    $region10: #{tpu_custom_call.1} parent=1 // pred_check
      _
    $region11: #{tpu_custom_call.1} parent=1 // pred_check_branch
      %14 = sbr.rel (0) target = $region13
    $region12: #{tpu_custom_call.1} parent=1 // pred_region
      _
    $region13: #{tpu_custom_call.1} parent=1 // pred_fallthru
      _
    %v15 = vld [vmem:[%s0] sm:$0xff]
    %v16 = vld [vmem:[%s0 + $0x8] sm:$0xff]
    %v17 = vld [vmem:[%s2] sm:$0xff]
    %v18 = vrcp.pop %v17
    %v19 = vmul.f32 1.0, %v18
    %v20 = vld [vmem:[%s1] sm:$0xff]
    %22 = vset.pattern.permute.xlu0 0
    %23 = vperm.xlu0 %22, %v20
    %v24 = vpop.permute.xlu0 %23
    %v26 = vsub.f32 %v15, %v24
    %v27 = vsub.f32 %v16, %v24
    %29 = vset.pattern.permute.xlu0 0
    %30 = vperm.xlu0 %29, %v19
    %v31 = vpop.permute.xlu0 %30
    %v33 = vmul.f32 %v26, %v31
    %v34 = vmul.f32 %v27, %v31
    %35 = vst [vmem:[#allocation2] sm:$0xff] %v33
    %36 = vst [vmem:[#allocation2 + $0x8] sm:$0xff] %v34
    // Predicated region
    $region14: #{tpu_custom_call.1} parent=1 // pred_check
      _
    $region15: #{tpu_custom_call.1} parent=1 // pred_check_branch
      %38 = sbr.rel (0) target = $region17
    $region16: #{tpu_custom_call.1} parent=1 // pred_region
      %s40 = ssub.s32 256, 256
      %41 = vsyncadd [#allocation3], %s40
      %s43 = sshll.u32 [#allocation2], 4
      %s44 = int_to_ptr.vmem [resolvable:$true] %s43
      %46 = dma.vmem_to_hbm [thread:$0]  %s44, 256, %s3, [#allocation3]
    $region17: #{tpu_custom_call.1} parent=1 // pred_fallthru
      _
    // Predicated region
    $region18: #{tpu_custom_call.1} parent=1 // pred_check
      _
    $region19: #{tpu_custom_call.1} parent=1 // pred_check_branch
      %48 = sbr.rel (0) target = $region21
    $region20: #{tpu_custom_call.1} parent=1 // pred_region
      %49 = dma.done [#allocation3], 256
    $region21: #{tpu_custom_call.1} parent=1 // pred_fallthru
      _
    %50 = vsyncpa [#allocation3], 1

</llo_original>
